<compile_context>
chip_gen: v5e
topology: v5e:2x2
jax: 0.10.0
libtpu: 0.0.40
codegen_flags: <defaults>
</compile_context>

<pallas_src>
import jax
import jax.numpy as jnp
from jax import lax
from jax.experimental import pallas as pl
from jax.experimental.pallas import tpu as pltpu

# ----------------------------- model config ---------------------------------
B = 2                  # batch
T = 8                  # sequence length == block_size
C = 32                 # n_embd
NUM_HEADS = 4
HEAD_SIZE = C // NUM_HEADS
HIDDEN = 4 * C         # feed-forward hidden
LN_EPS = 1e-5
BT = B * T             # flattened rows
HBT = NUM_HEADS * BT   # head-folded rows

# --------------------- packed parameter slab layout --------------------------
# One (P_ROWS, 128) f32 slab, all slices 8-sublane / 0-lane-offset aligned.
R_WQKV = 0             # rows   0:32  : [Wq/sqrt(C) | Wk | Wv | zeros]  (32,128)
R_WPROJ = 32           # rows  32:64  : Wproj  (32,32) at lanes 0:32
R_W1 = 64              # rows  64:96  : W1     (32,128)
R_W2 = 96              # rows  96:224 : W2     (128,32) at lanes 0:32
R_BIAS = 224           # rows 224:288 : additive attention mask (64,64)
R_VEC = 288            # rows 288:296 : ln1g, ln1b, bproj, ln2g, ln2b, b2, b1, 0
P_ROWS = 296


# ------------------------------- kernel -------------------------------------
def decoder_block_kernel(x_ref, p_ref, o_ref):
    x = x_ref[...]                                                   # (BT, C)

    # ---- pieces of the packed parameter slab (static, aligned slices) ----
    w_qkv = p_ref[R_WQKV:R_WQKV + C, :]                              # (C, 128)
    w_proj = p_ref[R_WPROJ:R_WPROJ + C, 0:C]                         # (C, C)
    w_ff1 = p_ref[R_W1:R_W1 + C, :]                                  # (C, 4C)
    w_ff2 = p_ref[R_W2:R_W2 + HIDDEN, 0:C]                           # (4C, C)
    bias = p_ref[R_BIAS:R_BIAS + HBT, 0:HBT]                         # (HBT, HBT)
    vec = p_ref[R_VEC:R_VEC + 8, :]                                  # (8, 128)
    ln1g, ln1b = vec[0:1, 0:C], vec[1:2, 0:C]
    bproj = vec[2:3, 0:C]
    ln2g, ln2b = vec[3:4, 0:C], vec[4:5, 0:C]
    b2 = vec[5:6, 0:C]
    b1 = vec[6:7, :]                                                 # (1, 4C)

    # ---------------- LayerNorm 1 ----------------
    mu = jnp.mean(x, axis=-1, keepdims=True)
    var = jnp.mean((x - mu) ** 2, axis=-1, keepdims=True)
    xn = (x - mu) * lax.rsqrt(var + LN_EPS) * ln1g + ln1b

    # ---------------- fused QKV: one (BT,C)@(C,128) MXU push ----------------
    # cols 0:C -> q (1/sqrt(C) already folded into Wq), C:2C -> k, 2C:3C -> v,
    # cols 3C:128 are zero padding (ignored).
    qkv = jnp.dot(xn, w_qkv, preferred_element_type=jnp.float32)    # (BT, 128)

    # fold head axis into rows: column blocks of HEAD_SIZE -> (3*HBT, hs);
    # rows [j*BT:(j+1)*BT] hold column block j.
    folded = jnp.concatenate(
        [qkv[:, j * HEAD_SIZE:(j + 1) * HEAD_SIZE]
         for j in range(3 * NUM_HEADS)],
        axis=0)                                                      # (3*HBT, hs)
    q = folded[0:HBT]                    # (HBT, hs), row = h*BT + (b*T + t)
    k = folded[HBT:2 * HBT]
    v = folded[2 * HBT:3 * HBT]

    # ---------------- attention: two MXU pushes over all heads --------------
    # head/batch/causal structure applied via a precomputed additive -1e30
    # bias (the diagonal is always live, so no -inf - -inf NaN hazard).
    s = lax.dot_general(q, k, (((1,), (1,)), ((), ())),
                        preferred_element_type=jnp.float32) + bias   # (HBT, HBT)
    m = jnp.max(s, axis=-1, keepdims=True)
    p = jnp.exp(s - m)
    p = p / jnp.sum(p, axis=-1, keepdims=True)       # exact softmax denominator
    o = jnp.dot(p, v, preferred_element_type=jnp.float32)            # (HBT, hs)

    # unfold heads back into lanes, then one (BT,C)@(C,C) output projection
    heads = jnp.concatenate(
        [o[h * BT:(h + 1) * BT, :] for h in range(NUM_HEADS)], axis=1)  # (BT, C)
    attn = jnp.dot(heads, w_proj, preferred_element_type=jnp.float32) + bproj
    # dropout: identity (eval mode)

    x1 = x + attn                                                    # residual 1

    # ---------------- LayerNorm 2 ----------------
    mu2 = jnp.mean(x1, axis=-1, keepdims=True)
    var2 = jnp.mean((x1 - mu2) ** 2, axis=-1, keepdims=True)
    x1n = (x1 - mu2) * lax.rsqrt(var2 + LN_EPS) * ln2g + ln2b

    # ---------------- FeedForward ----------------
    h1 = jnp.dot(x1n, w_ff1, preferred_element_type=jnp.float32) + b1    # (BT,4C)
    h1 = jnp.maximum(h1, 0.0)                                            # ReLU
    ff = jnp.dot(h1, w_ff2, preferred_element_type=jnp.float32) + b2     # (BT, C)
    # dropout: identity (eval mode)

    o_ref[...] = x1 + ff                                             # residual 2


# ------------------------------ wrapper --------------------------------------
def _pack_params(params):
    """Host-side packing of ALL parameters into one lane-dense (296,128) slab."""
    (ln1g, ln1b, wq, wk, wv, wproj, bproj,
     ln2g, ln2b, w1, b1, w2, b2) = params
    inv_scale = 1.0 / (float(C) ** 0.5)   # reference scales by sqrt(C), not hs

    P = jnp.zeros((P_ROWS, 128), jnp.float32)
    P = P.at[R_WQKV:R_WQKV + C, 0:C].set(wq * inv_scale)
    P = P.at[R_WQKV:R_WQKV + C, C:2 * C].set(wk)
    P = P.at[R_WQKV:R_WQKV + C, 2 * C:3 * C].set(wv)
    P = P.at[R_WPROJ:R_WPROJ + C, 0:C].set(wproj)
    P = P.at[R_W1:R_W1 + C, :].set(w1)
    P = P.at[R_W2:R_W2 + HIDDEN, 0:C].set(w2)

    # additive attention mask over head-folded rows/cols: idx = h*BT + b*T + t
    idx = jnp.arange(HBT)
    row, col = idx[:, None], idx[None, :]
    same_head = (row // BT) == (col // BT)
    same_batch = ((row % BT) // T) == ((col % BT) // T)
    causal = (col % T) <= (row % T)
    keep = same_head & same_batch & causal
    P = P.at[R_BIAS:R_BIAS + HBT, 0:HBT].set(
        jnp.where(keep, 0.0, -1e30).astype(jnp.float32))

    P = P.at[R_VEC + 0, 0:C].set(ln1g[0])
    P = P.at[R_VEC + 1, 0:C].set(ln1b[0])
    P = P.at[R_VEC + 2, 0:C].set(bproj[0])
    P = P.at[R_VEC + 3, 0:C].set(ln2g[0])
    P = P.at[R_VEC + 4, 0:C].set(ln2b[0])
    P = P.at[R_VEC + 5, 0:C].set(b2[0])
    P = P.at[R_VEC + 6, 0:HIDDEN].set(b1[0])
    return P


@jax.jit
def decoder_block(x, params):
    p_packed = _pack_params(params)
    x_flat = x.reshape(BT, C)
    vmem = pl.BlockSpec(memory_space=pltpu.MemorySpace.VMEM)

    out_flat = pl.pallas_call(
        decoder_block_kernel,
        out_shape=jax.ShapeDtypeStruct((BT, C), jnp.float32),
        in_specs=[vmem, vmem],
        out_specs=vmem,
        input_output_aliases={0: 0},   # donate x_flat's HBM buffer to the output
    )(x_flat, p_packed)

    return out_flat.reshape(B, T, C)


# ------------------------- pure-JAX reference --------------------------------
def decoder_block_ref(x, params):
    (ln1g, ln1b, wq, wk, wv, wproj, bproj,
     ln2g, ln2b, w1, b1, w2, b2) = params

    def ln(z, g, b):
        mu = jnp.mean(z, axis=-1, keepdims=True)
        var = jnp.mean((z - mu) ** 2, axis=-1, keepdims=True)
        return (z - mu) / jnp.sqrt(var + LN_EPS) * g[0] + b[0]

    xn = ln(x, ln1g, ln1b)
    q = xn @ wq
    k = xn @ wk
    v = xn @ wv
    causal = jnp.tril(jnp.ones((T, T), dtype=bool))
    outs = []
    for h in range(NUM_HEADS):
        lo, hi = h * HEAD_SIZE, (h + 1) * HEAD_SIZE
        wei = jnp.einsum('btd,bsd->bts', q[..., lo:hi], k[..., lo:hi]) / (C ** 0.5)
        wei = jnp.where(causal, wei, -jnp.inf)
        wei = jax.nn.softmax(wei, axis=-1)
        outs.append(jnp.einsum('bts,bsd->btd', wei, v[..., lo:hi]))
    attn = jnp.concatenate(outs, axis=-1) @ wproj + bproj[0]
    x1 = x + attn
    x1n = ln(x1, ln2g, ln2b)
    ff = jnp.maximum(x1n @ w1 + b1[0], 0.0) @ w2 + b2[0]
    return x1 + ff


# ------------------------------- main ----------------------------------------
if __name__ == "__main__":
    key = jax.random.PRNGKey(0)
    keys = jax.random.split(key, 16)

    scale = 0.1
    x = jax.random.normal(keys[0], (B, T, C), dtype=jnp.float32)

    params = (
        1.0 + scale * jax.random.normal(keys[1], (1, C), jnp.float32),   # ln1 gamma
        scale * jax.random.normal(keys[2], (1, C), jnp.float32),         # ln1 beta
        scale * jax.random.normal(keys[3], (C, C), jnp.float32),         # Wq (packed heads)
        scale * jax.random.normal(keys[4], (C, C), jnp.float32),         # Wk
        scale * jax.random.normal(keys[5], (C, C), jnp.float32),         # Wv
        scale * jax.random.normal(keys[6], (C, C), jnp.float32),         # Wproj
        scale * jax.random.normal(keys[7], (1, C), jnp.float32),         # bproj
        1.0 + scale * jax.random.normal(keys[8], (1, C), jnp.float32),   # ln2 gamma
        scale * jax.random.normal(keys[9], (1, C), jnp.float32),         # ln2 beta
        scale * jax.random.normal(keys[10], (C, HIDDEN), jnp.float32),   # W1
        scale * jax.random.normal(keys[11], (1, HIDDEN), jnp.float32),   # b1
        scale * jax.random.normal(keys[12], (HIDDEN, C), jnp.float32),   # W2
        scale * jax.random.normal(keys[13], (1, C), jnp.float32),        # b2
    )

    out = decoder_block(x, params)
    out = jax.block_until_ready(out)

    ref = decoder_block_ref(x, params)
    assert out.shape == (B, T, C)
    # Softmax now uses an exact divide; remaining tolerance only covers TPU
    # default-precision MXU matmuls (present in both kernel and XLA reference).
    assert jnp.allclose(out, ref, atol=2e-3, rtol=2e-3), (
        float(jnp.max(jnp.abs(out - ref)))
    )

    print("KERNEL_OK")
</pallas_src>

<mosaic_0001>
module attributes {stable_mosaic.version = 11 : i64} {
  func.func @decoder_block_kernel(%arg0: memref<16x32xf32, #tpu.memory_space<vmem>>, %arg1: memref<296x128xf32, #tpu.memory_space<vmem>>, %arg2: memref<16x32xf32, #tpu.memory_space<vmem>>) attributes {dimension_semantics = [], scalar_prefetch = 0 : i64, scratch_operands = 0 : i64, tpu.core_type = #tpu.core_type<tc>} {
    %c0 = arith.constant 0 : index
    %c0_0 = arith.constant 0 : index
    %0 = vector.load %arg0[%c0, %c0_0] : memref<16x32xf32, #tpu.memory_space<vmem>>, vector<16x32xf32>
    %c0_1 = arith.constant 0 : index
    %c0_2 = arith.constant 0 : index
    %1 = vector.load %arg1[%c0_1, %c0_2] : memref<296x128xf32, #tpu.memory_space<vmem>>, vector<32x128xf32>
    %c32 = arith.constant 32 : index
    %c0_3 = arith.constant 0 : index
    %2 = vector.load %arg1[%c32, %c0_3] : memref<296x128xf32, #tpu.memory_space<vmem>>, vector<32x32xf32>
    %c64 = arith.constant 64 : index
    %c0_4 = arith.constant 0 : index
    %3 = vector.load %arg1[%c64, %c0_4] : memref<296x128xf32, #tpu.memory_space<vmem>>, vector<32x128xf32>
    %c96 = arith.constant 96 : index
    %c0_5 = arith.constant 0 : index
    %4 = vector.load %arg1[%c96, %c0_5] : memref<296x128xf32, #tpu.memory_space<vmem>>, vector<128x32xf32>
    %c224 = arith.constant 224 : index
    %c0_6 = arith.constant 0 : index
    %5 = vector.load %arg1[%c224, %c0_6] : memref<296x128xf32, #tpu.memory_space<vmem>>, vector<64x64xf32>
    %c288 = arith.constant 288 : index
    %c0_7 = arith.constant 0 : index
    %6 = vector.load %arg1[%c288, %c0_7] : memref<296x128xf32, #tpu.memory_space<vmem>>, vector<8x128xf32>
    %7 = vector.extract_strided_slice %6 {offsets = [0, 0], sizes = [1, 32], strides = [1, 1]} : vector<8x128xf32> to vector<1x32xf32>
    %8 = vector.extract_strided_slice %6 {offsets = [1, 0], sizes = [1, 32], strides = [1, 1]} : vector<8x128xf32> to vector<1x32xf32>
    %9 = vector.extract_strided_slice %6 {offsets = [2, 0], sizes = [1, 32], strides = [1, 1]} : vector<8x128xf32> to vector<1x32xf32>
    %10 = vector.extract_strided_slice %6 {offsets = [3, 0], sizes = [1, 32], strides = [1, 1]} : vector<8x128xf32> to vector<1x32xf32>
    %11 = vector.extract_strided_slice %6 {offsets = [4, 0], sizes = [1, 32], strides = [1, 1]} : vector<8x128xf32> to vector<1x32xf32>
    %12 = vector.extract_strided_slice %6 {offsets = [5, 0], sizes = [1, 32], strides = [1, 1]} : vector<8x128xf32> to vector<1x32xf32>
    %13 = vector.extract_strided_slice %6 {offsets = [6, 0], sizes = [1, 128], strides = [1, 1]} : vector<8x128xf32> to vector<1x128xf32>
    %cst = arith.constant dense<0.000000e+00> : vector<16xf32>
    %14 = vector.multi_reduction <add>, %0, %cst [1] : vector<16x32xf32> to vector<16xf32>
    %15 = vector.shape_cast %14 : vector<16xf32> to vector<16x1xf32>
    %cst_8 = arith.constant 3.200000e+01 : f32
    %16 = vector.broadcast %cst_8 : f32 to vector<16x1xf32>
    %17 = arith.divf %15, %16 : vector<16x1xf32>
    %18 = vector.broadcast %17 : vector<16x1xf32> to vector<16x32xf32>
    %19 = arith.subf %0, %18 : vector<16x32xf32>
    %20 = arith.mulf %19, %19 : vector<16x32xf32>
    %cst_9 = arith.constant dense<0.000000e+00> : vector<16xf32>
    %21 = vector.multi_reduction <add>, %20, %cst_9 [1] : vector<16x32xf32> to vector<16xf32>
    %22 = vector.shape_cast %21 : vector<16xf32> to vector<16x1xf32>
    %cst_10 = arith.constant 3.200000e+01 : f32
    %23 = vector.broadcast %cst_10 : f32 to vector<16x1xf32>
    %24 = arith.divf %22, %23 : vector<16x1xf32>
    %25 = vector.broadcast %17 : vector<16x1xf32> to vector<16x32xf32>
    %26 = arith.subf %0, %25 : vector<16x32xf32>
    %cst_11 = arith.constant 9.99999974E-6 : f32
    %27 = vector.broadcast %cst_11 : f32 to vector<16x1xf32>
    %28 = arith.addf %24, %27 : vector<16x1xf32>
    %29 = math.rsqrt %28 : vector<16x1xf32>
    %30 = vector.broadcast %29 : vector<16x1xf32> to vector<16x32xf32>
    %31 = arith.mulf %26, %30 : vector<16x32xf32>
    %32 = vector.broadcast %7 : vector<1x32xf32> to vector<16x32xf32>
    %33 = arith.mulf %31, %32 : vector<16x32xf32>
    %34 = vector.broadcast %8 : vector<1x32xf32> to vector<16x32xf32>
    %35 = arith.addf %33, %34 : vector<16x32xf32>
    %cst_12 = arith.constant dense<0.000000e+00> : vector<16x128xf32>
    %36 = tpu.matmul %35, %1, %cst_12 {dimension_numbers = #tpu.dot_dimension_numbers<[1], [0], [0], [1], [0, 0, 1, 1], [], []>} : vector<16x32xf32>, vector<32x128xf32>, vector<16x128xf32> -> vector<16x128xf32>
    %37 = vector.extract_strided_slice %36 {offsets = [0, 0], sizes = [16, 8], strides = [1, 1]} : vector<16x128xf32> to vector<16x8xf32>
    %38 = vector.extract_strided_slice %36 {offsets = [0, 8], sizes = [16, 8], strides = [1, 1]} : vector<16x128xf32> to vector<16x8xf32>
    %39 = vector.extract_strided_slice %36 {offsets = [0, 16], sizes = [16, 8], strides = [1, 1]} : vector<16x128xf32> to vector<16x8xf32>
    %40 = vector.extract_strided_slice %36 {offsets = [0, 24], sizes = [16, 8], strides = [1, 1]} : vector<16x128xf32> to vector<16x8xf32>
    %41 = vector.extract_strided_slice %36 {offsets = [0, 32], sizes = [16, 8], strides = [1, 1]} : vector<16x128xf32> to vector<16x8xf32>
    %42 = vector.extract_strided_slice %36 {offsets = [0, 40], sizes = [16, 8], strides = [1, 1]} : vector<16x128xf32> to vector<16x8xf32>
    %43 = vector.extract_strided_slice %36 {offsets = [0, 48], sizes = [16, 8], strides = [1, 1]} : vector<16x128xf32> to vector<16x8xf32>
    %44 = vector.extract_strided_slice %36 {offsets = [0, 56], sizes = [16, 8], strides = [1, 1]} : vector<16x128xf32> to vector<16x8xf32>
    %45 = vector.extract_strided_slice %36 {offsets = [0, 64], sizes = [16, 8], strides = [1, 1]} : vector<16x128xf32> to vector<16x8xf32>
    %46 = vector.extract_strided_slice %36 {offsets = [0, 72], sizes = [16, 8], strides = [1, 1]} : vector<16x128xf32> to vector<16x8xf32>
    %47 = vector.extract_strided_slice %36 {offsets = [0, 80], sizes = [16, 8], strides = [1, 1]} : vector<16x128xf32> to vector<16x8xf32>
    %48 = vector.extract_strided_slice %36 {offsets = [0, 88], sizes = [16, 8], strides = [1, 1]} : vector<16x128xf32> to vector<16x8xf32>
    %49 = tpu.concatenate %37, %38, %39, %40, %41, %42, %43, %44, %45, %46, %47, %48 in 0 : vector<16x8xf32>, vector<16x8xf32>, vector<16x8xf32>, vector<16x8xf32>, vector<16x8xf32>, vector<16x8xf32>, vector<16x8xf32>, vector<16x8xf32>, vector<16x8xf32>, vector<16x8xf32>, vector<16x8xf32>, vector<16x8xf32> -> vector<192x8xf32>
    %50 = vector.extract_strided_slice %49 {offsets = [0, 0], sizes = [64, 8], strides = [1, 1]} : vector<192x8xf32> to vector<64x8xf32>
    %51 = vector.extract_strided_slice %49 {offsets = [64, 0], sizes = [64, 8], strides = [1, 1]} : vector<192x8xf32> to vector<64x8xf32>
    %52 = vector.extract_strided_slice %49 {offsets = [128, 0], sizes = [64, 8], strides = [1, 1]} : vector<192x8xf32> to vector<64x8xf32>
    %cst_13 = arith.constant dense<0.000000e+00> : vector<64x64xf32>
    %53 = tpu.matmul %50, %51, %cst_13 {dimension_numbers = #tpu.dot_dimension_numbers<[1], [1], [0], [0], [0, 0, 1, 0], [], []>} : vector<64x8xf32>, vector<64x8xf32>, vector<64x64xf32> -> vector<64x64xf32>
    %54 = arith.addf %53, %5 : vector<64x64xf32>
    %cst_14 = arith.constant dense<0xFF800000> : vector<64xf32>
    %55 = vector.multi_reduction <maximumf>, %54, %cst_14 [1] : vector<64x64xf32> to vector<64xf32>
    %56 = vector.shape_cast %55 : vector<64xf32> to vector<64x1xf32>
    %57 = vector.broadcast %56 : vector<64x1xf32> to vector<64x64xf32>
    %58 = arith.subf %54, %57 : vector<64x64xf32>
    %59 = math.exp %58 : vector<64x64xf32>
    %cst_15 = arith.constant dense<0.000000e+00> : vector<64xf32>
    %60 = vector.multi_reduction <add>, %59, %cst_15 [1] : vector<64x64xf32> to vector<64xf32>
    %61 = vector.shape_cast %60 : vector<64xf32> to vector<64x1xf32>
    %62 = vector.broadcast %61 : vector<64x1xf32> to vector<64x64xf32>
    %63 = arith.divf %59, %62 : vector<64x64xf32>
    %cst_16 = arith.constant dense<0.000000e+00> : vector<64x8xf32>
    %64 = tpu.matmul %63, %52, %cst_16 {dimension_numbers = #tpu.dot_dimension_numbers<[1], [0], [0], [1], [0, 0, 1, 1], [], []>} : vector<64x64xf32>, vector<64x8xf32>, vector<64x8xf32> -> vector<64x8xf32>
    %65 = vector.extract_strided_slice %64 {offsets = [0, 0], sizes = [16, 8], strides = [1, 1]} : vector<64x8xf32> to vector<16x8xf32>
    %66 = vector.extract_strided_slice %64 {offsets = [16, 0], sizes = [16, 8], strides = [1, 1]} : vector<64x8xf32> to vector<16x8xf32>
    %67 = vector.extract_strided_slice %64 {offsets = [32, 0], sizes = [16, 8], strides = [1, 1]} : vector<64x8xf32> to vector<16x8xf32>
    %68 = vector.extract_strided_slice %64 {offsets = [48, 0], sizes = [16, 8], strides = [1, 1]} : vector<64x8xf32> to vector<16x8xf32>
    %69 = tpu.concatenate %65, %66, %67, %68 in 1 : vector<16x8xf32>, vector<16x8xf32>, vector<16x8xf32>, vector<16x8xf32> -> vector<16x32xf32>
    %cst_17 = arith.constant dense<0.000000e+00> : vector<16x32xf32>
    %70 = tpu.matmul %69, %2, %cst_17 {dimension_numbers = #tpu.dot_dimension_numbers<[1], [0], [0], [1], [0, 0, 1, 1], [], []>} : vector<16x32xf32>, vector<32x32xf32>, vector<16x32xf32> -> vector<16x32xf32>
    %71 = vector.broadcast %9 : vector<1x32xf32> to vector<16x32xf32>
    %72 = arith.addf %70, %71 : vector<16x32xf32>
    %73 = arith.addf %0, %72 : vector<16x32xf32>
    %cst_18 = arith.constant dense<0.000000e+00> : vector<16xf32>
    %74 = vector.multi_reduction <add>, %73, %cst_18 [1] : vector<16x32xf32> to vector<16xf32>
    %75 = vector.shape_cast %74 : vector<16xf32> to vector<16x1xf32>
    %cst_19 = arith.constant 3.200000e+01 : f32
    %76 = vector.broadcast %cst_19 : f32 to vector<16x1xf32>
    %77 = arith.divf %75, %76 : vector<16x1xf32>
    %78 = vector.broadcast %77 : vector<16x1xf32> to vector<16x32xf32>
    %79 = arith.subf %73, %78 : vector<16x32xf32>
    %80 = arith.mulf %79, %79 : vector<16x32xf32>
    %cst_20 = arith.constant dense<0.000000e+00> : vector<16xf32>
    %81 = vector.multi_reduction <add>, %80, %cst_20 [1] : vector<16x32xf32> to vector<16xf32>
    %82 = vector.shape_cast %81 : vector<16xf32> to vector<16x1xf32>
    %cst_21 = arith.constant 3.200000e+01 : f32
    %83 = vector.broadcast %cst_21 : f32 to vector<16x1xf32>
    %84 = arith.divf %82, %83 : vector<16x1xf32>
    %85 = vector.broadcast %77 : vector<16x1xf32> to vector<16x32xf32>
    %86 = arith.subf %73, %85 : vector<16x32xf32>
    %cst_22 = arith.constant 9.99999974E-6 : f32
    %87 = vector.broadcast %cst_22 : f32 to vector<16x1xf32>
    %88 = arith.addf %84, %87 : vector<16x1xf32>
    %89 = math.rsqrt %88 : vector<16x1xf32>
    %90 = vector.broadcast %89 : vector<16x1xf32> to vector<16x32xf32>
    %91 = arith.mulf %86, %90 : vector<16x32xf32>
    %92 = vector.broadcast %10 : vector<1x32xf32> to vector<16x32xf32>
    %93 = arith.mulf %91, %92 : vector<16x32xf32>
    %94 = vector.broadcast %11 : vector<1x32xf32> to vector<16x32xf32>
    %95 = arith.addf %93, %94 : vector<16x32xf32>
    %cst_23 = arith.constant dense<0.000000e+00> : vector<16x128xf32>
    %96 = tpu.matmul %95, %3, %cst_23 {dimension_numbers = #tpu.dot_dimension_numbers<[1], [0], [0], [1], [0, 0, 1, 1], [], []>} : vector<16x32xf32>, vector<32x128xf32>, vector<16x128xf32> -> vector<16x128xf32>
    %97 = vector.broadcast %13 : vector<1x128xf32> to vector<16x128xf32>
    %98 = arith.addf %96, %97 : vector<16x128xf32>
    %cst_24 = arith.constant 0.000000e+00 : f32
    %99 = vector.broadcast %cst_24 : f32 to vector<16x128xf32>
    %100 = arith.maximumf %98, %99 : vector<16x128xf32>
    %cst_25 = arith.constant dense<0.000000e+00> : vector<16x32xf32>
    %101 = tpu.matmul %100, %4, %cst_25 {dimension_numbers = #tpu.dot_dimension_numbers<[1], [0], [0], [1], [0, 0, 1, 1], [], []>} : vector<16x128xf32>, vector<128x32xf32>, vector<16x32xf32> -> vector<16x32xf32>
    %102 = vector.broadcast %12 : vector<1x32xf32> to vector<16x32xf32>
    %103 = arith.addf %101, %102 : vector<16x32xf32>
    %104 = arith.addf %73, %103 : vector<16x32xf32>
    %c0_26 = arith.constant 0 : index
    %c0_27 = arith.constant 0 : index
    %105 = vector.load %arg2[%c0_26, %c0_27] : memref<16x32xf32, #tpu.memory_space<vmem>>, vector<16x32xf32>
    tpu.vector_store %arg2[%c0_26, %c0_27], %104 {strides = array<i32>} : memref<16x32xf32, #tpu.memory_space<vmem>>, vector<16x32xf32>,
    return
  }
}

</mosaic_0001>

<llo_original>
// kernel: decoder_block.1
$region0: #{decoder_block.1}
  #allocation0 [shape = 'u32[]', space=smem, size = 0x4, offset = 0x4, fixed_abs, tag = 'smem constant byte address 0x4 - core index']
  #allocation1 [shape = 'u32[72,128]{1,0:T(1,128)}', space=vmem, size = 0x9000, scoped, tag = 'internal scratch']
  %s0 = inlined_call_operand.vmem [shape: f32[16,32], index: 0, kind: input, shape index: {}, may-alias: {0,2}]
  %s1 = inlined_call_operand.vmem [shape: f32[296,128], index: 1, kind: input, shape index: {}]
  %s2 = inlined_call_operand.vmem [shape: f32[16,32], index: 2, kind: output, shape index: {}, may-alias: {0,2}]
  %s3 = sld [smem:[#allocation0]]
  $region18: #{decoder_block.1} parent=0
    _
  %s5 = ssub.s32 1, %s3
  %s6 = scalar_select 0, %s5, %s3
  // Predicated region
  $region2: #{decoder_block.1} parent=0 // pred_check
    _
  $region3: #{decoder_block.1} parent=0 // pred_check_branch
    %8 = sbr.rel (0) target = $region5
  $region4: #{decoder_block.1} parent=0 // pred_region
    _
  $region5: #{decoder_block.1} parent=0 // pred_fallthru
    _
  // Predicated region
  $region6: #{decoder_block.1} parent=0 // pred_check
    _
  $region7: #{decoder_block.1} parent=0 // pred_check_branch
    %10 = sbr.rel (0) target = $region9
  $region8: #{decoder_block.1} parent=0 // pred_region
    _
  $region9: #{decoder_block.1} parent=0 // pred_fallthru
    _
  %v11 = vld [vmem:[%s0] sm:$0xff]
  %v12 = vld [vmem:[%s0 + $0x8] sm:$0xff]
  %v13 = vld [vmem:[%s1] sm:$0xff]
  %v14 = vld [vmem:[%s1 + $0x8] sm:$0xff]
  %v15 = vld [vmem:[%s1 + $0x10] sm:$0xff]
  %v16 = vld [vmem:[%s1 + $0x18] sm:$0xff]
  %v17 = vld [vmem:[%s1 + $0x20] sm:$0xff]
  %v18 = vld [vmem:[%s1 + $0x28] sm:$0xff]
  %v19 = vld [vmem:[%s1 + $0x30] sm:$0xff]
  %v20 = vld [vmem:[%s1 + $0x38] sm:$0xff]
  %v21 = vld [vmem:[%s1 + $0x40] sm:$0xff]
  %v22 = vld [vmem:[%s1 + $0x48] sm:$0xff]
  %v23 = vld [vmem:[%s1 + $0x50] sm:$0xff]
  %v24 = vld [vmem:[%s1 + $0x58] sm:$0xff]
  %v25 = vld [vmem:[%s1 + $0x60] sm:$0xff]
  %v26 = vld [vmem:[%s1 + $0x68] sm:$0xff]
  %v27 = vld [vmem:[%s1 + $0x70] sm:$0xff]
  %v28 = vld [vmem:[%s1 + $0x78] sm:$0xff]
  %v29 = vld [vmem:[%s1 + $0x80] sm:$0xff]
  %v30 = vld [vmem:[%s1 + $0x88] sm:$0xff]
  %v31 = vld [vmem:[%s1 + $0x90] sm:$0xff]
  %v32 = vld [vmem:[%s1 + $0x98] sm:$0xff]
  %v33 = vld [vmem:[%s1 + $0xa0] sm:$0xff]
  %v34 = vld [vmem:[%s1 + $0xa8] sm:$0xff]
  %v35 = vld [vmem:[%s1 + $0xb0] sm:$0xff]
  %v36 = vld [vmem:[%s1 + $0xb8] sm:$0xff]
  %v37 = vld [vmem:[%s1 + $0xc0] sm:$0xff]
  %v38 = vld [vmem:[%s1 + $0xc8] sm:$0xff]
  %v39 = vld [vmem:[%s1 + $0xd0] sm:$0xff]
  %v40 = vld [vmem:[%s1 + $0xd8] sm:$0xff]
  %v41 = vld [vmem:[%s1 + $0xe0] sm:$0xff]
  %v42 = vld [vmem:[%s1 + $0xe8] sm:$0xff]
  %v43 = vld [vmem:[%s1 + $0xf0] sm:$0xff]
  %v44 = vld [vmem:[%s1 + $0xf8] sm:$0xff]
  %v45 = vld [vmem:[%s1 + $0x100] sm:$0xff]
  %v46 = vld [vmem:[%s1 + $0x108] sm:$0xff]
  %v47 = vld [vmem:[%s1 + $0x110] sm:$0xff]
  %v48 = vld [vmem:[%s1 + $0x118] sm:$0xff]
  %v49 = vld [vmem:[%s1 + $0x120] sm:$0xff]
  %vm50 = vcmask 261120
  %v51 = vsel %vm50, %v11, 0.0
  %52 = vadd.xlane.f32.xlu0 %v51
  %v53 = vpop.xlane.xlu0 %52
  %v54 = vsel %vm50, %v12, 0.0
  %55 = vadd.xlane.f32.xlu0 %v54
  %v56 = vpop.xlane.xlu0 %55
  %v57 = vrcp.pop 32.0
  %v58 = vmul.f32 32.0, %v57
  %v59 = vsub.f32 1.0, %v58
  %v60 = vmul.f32 %v57, %v59
  %v61 = vadd.f32 %v57, %v60
  %vm62 = vweird.f32 %v57
  %v63 = vsel %vm62, %v57, %v61
  %v64 = vmul.f32 %v53, %v63
  %v65 = vmul.f32 %v56, %v63
  %v66 = vsub.f32 %v11, %v64
  %v67 = vsub.f32 %v12, %v65
  %v68 = vmul.f32 %v66, %v66
  %v69 = vmul.f32 %v67, %v67
  %v70 = vsel %vm50, %v68, 0.0
  %71 = vadd.xlane.f32.xlu0 %v70
  %v72 = vpop.xlane.xlu0 %71
  %v73 = vsel %vm50, %v69, 0.0
  %74 = vadd.xlane.f32.xlu0 %v73
  %v75 = vpop.xlane.xlu0 %74
  %v76 = vmul.f32 %v72, %v63
  %v77 = vmul.f32 %v75, %v63
  %v78 = vadd.f32 %v76, 1e-05
  %v79 = vadd.f32 %v77, 1e-05
  %v80 = vrsqrt.pop %v78
  %v81 = vmul.f32 %v80, %v78
  %v82 = vmul.f32 %v81, %v80
  %v83 = vmul.f32 0.5, %v82
  %v84 = vsub.f32 1.5, %v83
  %v85 = vmul.f32 %v80, %v84
  %vm86 = vweird.f32 %v78
  %vm87 = vweird.f32 %v80
  %vm88 = vmor %vm86, %vm87
  %v89 = vsel %vm88, %v80, %v85
  %v90 = vrsqrt.pop %v79
  %v91 = vmul.f32 %v90, %v79
  %v92 = vmul.f32 %v91, %v90
  %v93 = vmul.f32 0.5, %v92
  %v94 = vsub.f32 1.5, %v93
  %v95 = vmul.f32 %v90, %v94
  %vm96 = vweird.f32 %v79
  %vm97 = vweird.f32 %v90
  %vm98 = vmor %vm96, %vm97
  %v99 = vsel %vm98, %v90, %v95
  %v100 = vmul.f32 %v66, %v89
  %v101 = vmul.f32 %v67, %v99
  %v102 = vperm.slane %v49, 0
  %v103 = vmul.f32 %v100, %v102
  %v104 = vmul.f32 %v101, %v102
  %v105 = vperm.slane %v49, 1
  %v106 = vadd.f32 %v103, %v105
  %v107 = vadd.f32 %v104, %v105
  %v109 = vsel %vm50, %v106, 0
  %v112 = vsel %vm50, %v107, 0
  %114 = vmatpush.msra.mxu0 0.0
  %115 = vmatpush.msra.mxu0 0.0
  %116 = vmatpush.msra.mxu0 0.0
  %117 = vmatpush.msra.mxu0 0.0
  %118 = vmatpush.msra.mxu0 0.0
  %119 = vmatpush.msra.mxu0 0.0
  %120 = vmatpush.msra.mxu0 0.0
  %121 = vmatpush.msra.mxu0 0.0
  %122 = vmatpush.msra.mxu0 0.0
  %123 = vmatpush.msra.mxu0 0.0
  %124 = vmatpush.msra.mxu0 0.0
  %125 = vmatpush.msra.mxu0 0.0
  %126 = vmatpush.msra.mxu0 %v16
  %127 = vmatpush.msra.mxu0 %v15
  %128 = vmatpush.msra.mxu0 %v14
  %129 = vmatpush.msra.mxu0 %v13
  %130 = vmatmul.f32.gmra.mxu0 %v109
  %v131 = vpop.f32.mrf.mxu0
  %v132 = vadd.f32 0.0, %v131
  %133 = vmatmul.f32.gmra.mxu0 %v112
  %v134 = vpop.f32.mrf.mxu0
  %v135 = vadd.f32 0.0, %v134
  %136 = vdwg.mxu0
  %139 = vrot.lane.b32.xlu0 %v132, 120
  %v140 = vpop.permute.xlu0 %139
  %141 = vrot.lane.b32.xlu0 %v135, 120
  %v142 = vpop.permute.xlu0 %141
  %143 = vrot.lane.b32.xlu0 %v132, 112
  %v144 = vpop.permute.xlu0 %143
  %145 = vrot.lane.b32.xlu0 %v135, 112
  %v146 = vpop.permute.xlu0 %145
  %147 = vrot.lane.b32.xlu0 %v132, 104
  %v148 = vpop.permute.xlu0 %147
  %149 = vrot.lane.b32.xlu0 %v135, 104
  %v150 = vpop.permute.xlu0 %149
  %151 = vrot.lane.b32.xlu0 %v132, 96
  %v152 = vpop.permute.xlu0 %151
  %153 = vrot.lane.b32.xlu0 %v135, 96
  %v154 = vpop.permute.xlu0 %153
  %155 = vrot.lane.b32.xlu0 %v132, 88
  %v156 = vpop.permute.xlu0 %155
  %157 = vrot.lane.b32.xlu0 %v135, 88
  %v158 = vpop.permute.xlu0 %157
  %159 = vrot.lane.b32.xlu0 %v132, 80
  %v160 = vpop.permute.xlu0 %159
  %161 = vrot.lane.b32.xlu0 %v135, 80
  %v162 = vpop.permute.xlu0 %161
  %163 = vrot.lane.b32.xlu0 %v132, 72
  %v164 = vpop.permute.xlu0 %163
  %165 = vrot.lane.b32.xlu0 %v135, 72
  %v166 = vpop.permute.xlu0 %165
  %167 = vrot.lane.b32.xlu0 %v132, 64
  %v168 = vpop.permute.xlu0 %167
  %169 = vrot.lane.b32.xlu0 %v135, 64
  %v170 = vpop.permute.xlu0 %169
  %173 = vrot.lane.b32.xlu0 %v132, 56
  %v174 = vpop.permute.xlu0 %173
  %175 = vrot.lane.b32.xlu0 %v135, 56
  %v176 = vpop.permute.xlu0 %175
  %179 = vrot.lane.b32.xlu0 %v132, 48
  %v180 = vpop.permute.xlu0 %179
  %181 = vrot.lane.b32.xlu0 %v135, 48
  %v182 = vpop.permute.xlu0 %181
  %185 = vrot.lane.b32.xlu0 %v132, 40
  %v186 = vpop.permute.xlu0 %185
  %187 = vrot.lane.b32.xlu0 %v135, 40
  %v188 = vpop.permute.xlu0 %187
  %vm191 = vcmask 64512
  %v192 = vsel %vm191, %v132, 0
  %v194 = vsel %vm191, %v135, 0
  %v196 = vsel %vm191, %v140, 0
  %v198 = vsel %vm191, %v142, 0
  %v200 = vsel %vm191, %v144, 0
  %v202 = vsel %vm191, %v146, 0
  %v204 = vsel %vm191, %v148, 0
  %v206 = vsel %vm191, %v150, 0
  %v208 = vsel %vm191, %v152, 0
  %v210 = vsel %vm191, %v154, 0
  %v212 = vsel %vm191, %v156, 0
  %v214 = vsel %vm191, %v158, 0
  %v216 = vsel %vm191, %v160, 0
  %v218 = vsel %vm191, %v162, 0
  %v220 = vsel %vm191, %v164, 0
  %v222 = vsel %vm191, %v166, 0
  %224 = vmatpush.xpose.msra.mxu0 0.0
  %225 = vmatpush.xpose.msra.mxu0 0.0
  %226 = vmatpush.xpose.msra.mxu0 0.0
  %227 = vmatpush.xpose.msra.mxu0 0.0
  %228 = vmatpush.xpose.msra.mxu0 0.0
  %229 = vmatpush.xpose.msra.mxu0 0.0
  %230 = vmatpush.xpose.msra.mxu0 0.0
  %231 = vmatpush.xpose.msra.mxu0 0.0
  %232 = vmatpush.xpose.msra.mxu0 %v222
  %233 = vmatpush.xpose.msra.mxu0 %v220
  %234 = vmatpush.xpose.msra.mxu0 %v218
  %235 = vmatpush.xpose.msra.mxu0 %v216
  %236 = vmatpush.xpose.msra.mxu0 %v214
  %237 = vmatpush.xpose.msra.mxu0 %v212
  %238 = vmatpush.xpose.msra.mxu0 %v210
  %239 = vmatpush.xpose.msra.mxu0 %v208
  %240 = vmatmul.f32.gmra.mxu0 %v192
  %v241 = vpop.f32.mrf.mxu0
  %v242 = vadd.f32 %v41, %v241
  %243 = vmatmul.f32.gmra.mxu0 %v194
  %v244 = vpop.f32.mrf.mxu0
  %v245 = vadd.f32 %v42, %v244
  %246 = vmatmul.f32.gmra.mxu0 %v196
  %v247 = vpop.f32.mrf.mxu0
  %v248 = vadd.f32 %v43, %v247
  %249 = vmatmul.f32.gmra.mxu0 %v198
  %v250 = vpop.f32.mrf.mxu0
  %v251 = vadd.f32 %v44, %v250
  %252 = vmatmul.f32.gmra.mxu0 %v200
  %v253 = vpop.f32.mrf.mxu0
  %v254 = vadd.f32 %v45, %v253
  %255 = vmatmul.f32.gmra.mxu0 %v202
  %v256 = vpop.f32.mrf.mxu0
  %v257 = vadd.f32 %v46, %v256
  %258 = vmatmul.f32.gmra.mxu0 %v204
  %v259 = vpop.f32.mrf.mxu0
  %v260 = vadd.f32 %v47, %v259
  %261 = vmatmul.f32.gmra.mxu0 %v206
  %v262 = vpop.f32.mrf.mxu0
  %v263 = vadd.f32 %v48, %v262
  %264 = vdwg.mxu0
  %vm265 = vcmask 523264
  %v266 = vsel %vm265, %v242, -inf
  %267 = vmax.xlane.f32.xlu0 %v266
  %v268 = vpop.xlane.xlu0 %267
  %v269 = vsel %vm265, %v245, -inf
  %270 = vmax.xlane.f32.xlu0 %v269
  %v271 = vpop.xlane.xlu0 %270
  %v272 = vsel %vm265, %v248, -inf
  %273 = vmax.xlane.f32.xlu0 %v272
  %v274 = vpop.xlane.xlu0 %273
  %v275 = vsel %vm265, %v251, -inf
  %276 = vmax.xlane.f32.xlu0 %v275
  %v277 = vpop.xlane.xlu0 %276
  %v278 = vsel %vm265, %v254, -inf
  %279 = vmax.xlane.f32.xlu0 %v278
  %v280 = vpop.xlane.xlu0 %279
  %v281 = vsel %vm265, %v257, -inf
  %282 = vmax.xlane.f32.xlu0 %v281
  %v283 = vpop.xlane.xlu0 %282
  %v284 = vsel %vm265, %v260, -inf
  %285 = vmax.xlane.f32.xlu0 %v284
  %v286 = vpop.xlane.xlu0 %285
  %v287 = vsel %vm265, %v263, -inf
  %288 = vmax.xlane.f32.xlu0 %v287
  %v289 = vpop.xlane.xlu0 %288
  %v290 = vsub.f32 %v242, %v268
  %v291 = vsub.f32 %v245, %v271
  %v292 = vsub.f32 %v248, %v274
  %v293 = vsub.f32 %v251, %v277
  %v294 = vsub.f32 %v254, %v280
  %v295 = vsub.f32 %v257, %v283
  %v296 = vsub.f32 %v260, %v286
  %v297 = vsub.f32 %v263, %v289
  %v298 = vmul.f32 %v290, 1.442695
  %v299 = vpow.pop %v298
  %v300 = vmul.f32 %v291, 1.442695
  %v301 = vpow.pop %v300
  %v302 = vmul.f32 %v292, 1.442695
  %v303 = vpow.pop %v302
  %v304 = vmul.f32 %v293, 1.442695
  %v305 = vpow.pop %v304
  %v306 = vmul.f32 %v294, 1.442695
  %v307 = vpow.pop %v306
  %v308 = vmul.f32 %v295, 1.442695
  %v309 = vpow.pop %v308
  %v310 = vmul.f32 %v296, 1.442695
  %v311 = vpow.pop %v310
  %v312 = vmul.f32 %v297, 1.442695
  %v313 = vpow.pop %v312
  %v314 = vsel %vm265, %v299, 0.0
  %315 = vadd.xlane.f32.xlu0 %v314
  %v316 = vpop.xlane.xlu0 %315
  %v317 = vsel %vm265, %v301, 0.0
  %318 = vadd.xlane.f32.xlu0 %v317
  %v319 = vpop.xlane.xlu0 %318
  %v320 = vsel %vm265, %v303, 0.0
  %321 = vadd.xlane.f32.xlu0 %v320
  %v322 = vpop.xlane.xlu0 %321
  %v323 = vsel %vm265, %v305, 0.0
  %324 = vadd.xlane.f32.xlu0 %v323
  %v325 = vpop.xlane.xlu0 %324
  %v326 = vsel %vm265, %v307, 0.0
  %327 = vadd.xlane.f32.xlu0 %v326
  %v328 = vpop.xlane.xlu0 %327
  %v329 = vsel %vm265, %v309, 0.0
  %330 = vadd.xlane.f32.xlu0 %v329
  %v331 = vpop.xlane.xlu0 %330
  %v332 = vsel %vm265, %v311, 0.0
  %333 = vadd.xlane.f32.xlu0 %v332
  %v334 = vpop.xlane.xlu0 %333
  %v335 = vsel %vm265, %v313, 0.0
  %336 = vadd.xlane.f32.xlu0 %v335
  %v337 = vpop.xlane.xlu0 %336
  %v338 = vrcp.pop %v316
  %v339 = vmul.f32 %v316, %v338
  %v340 = vsub.f32 1.0, %v339
  %v341 = vmul.f32 %v338, %v340
  %v342 = vadd.f32 %v338, %v341
  %vm343 = vweird.f32 %v316
  %vm344 = vweird.f32 %v338
  %vm345 = vmor %vm343, %vm344
  %v346 = vsel %vm345, %v338, %v342
  %v347 = vand.u32 2147483647, %v316
  %vm348 = vcmp.eq.f32.partialorder %v347, 8.507059e+37
  %v349 = vand.u32 %v316, 2147483648
  %v350 = vor.u32 1.1754944e-38, %v349
  %v351 = vsel %vm348, %v350, %v346
  %v352 = vmul.f32 %v299, %v351
  %v353 = vrcp.pop %v319
  %v354 = vmul.f32 %v319, %v353
  %v355 = vsub.f32 1.0, %v354
  %v356 = vmul.f32 %v353, %v355
  %v357 = vadd.f32 %v353, %v356
  %vm358 = vweird.f32 %v319
  %vm359 = vweird.f32 %v353
  %vm360 = vmor %vm358, %vm359
  %v361 = vsel %vm360, %v353, %v357
  %v362 = vand.u32 2147483647, %v319
  %vm363 = vcmp.eq.f32.partialorder %v362, 8.507059e+37
  %v364 = vand.u32 %v319, 2147483648
  %v365 = vor.u32 1.1754944e-38, %v364
  %v366 = vsel %vm363, %v365, %v361
  %v367 = vmul.f32 %v301, %v366
  %v368 = vrcp.pop %v322
  %v369 = vmul.f32 %v322, %v368
  %v370 = vsub.f32 1.0, %v369
  %v371 = vmul.f32 %v368, %v370
  %v372 = vadd.f32 %v368, %v371
  %vm373 = vweird.f32 %v322
  %vm374 = vweird.f32 %v368
  %vm375 = vmor %vm373, %vm374
  %v376 = vsel %vm375, %v368, %v372
  %v377 = vand.u32 2147483647, %v322
  %vm378 = vcmp.eq.f32.partialorder %v377, 8.507059e+37
  %v379 = vand.u32 %v322, 2147483648
  %v380 = vor.u32 1.1754944e-38, %v379
  %v381 = vsel %vm378, %v380, %v376
  %v382 = vmul.f32 %v303, %v381
  %v383 = vrcp.pop %v325
  %v384 = vmul.f32 %v325, %v383
  %v385 = vsub.f32 1.0, %v384
  %v386 = vmul.f32 %v383, %v385
  %v387 = vadd.f32 %v383, %v386
  %vm388 = vweird.f32 %v325
  %vm389 = vweird.f32 %v383
  %vm390 = vmor %vm388, %vm389
  %v391 = vsel %vm390, %v383, %v387
  %v392 = vand.u32 2147483647, %v325
  %vm393 = vcmp.eq.f32.partialorder %v392, 8.507059e+37
  %v394 = vand.u32 %v325, 2147483648
  %v395 = vor.u32 1.1754944e-38, %v394
  %v396 = vsel %vm393, %v395, %v391
  %v397 = vmul.f32 %v305, %v396
  %v398 = vrcp.pop %v328
  %v399 = vmul.f32 %v328, %v398
  %v400 = vsub.f32 1.0, %v399
  %v401 = vmul.f32 %v398, %v400
  %v402 = vadd.f32 %v398, %v401
  %vm403 = vweird.f32 %v328
  %vm404 = vweird.f32 %v398
  %vm405 = vmor %vm403, %vm404
  %v406 = vsel %vm405, %v398, %v402
  %v407 = vand.u32 2147483647, %v328
  %vm408 = vcmp.eq.f32.partialorder %v407, 8.507059e+37
  %v409 = vand.u32 %v328, 2147483648
  %v410 = vor.u32 1.1754944e-38, %v409
  %v411 = vsel %vm408, %v410, %v406
  %v412 = vmul.f32 %v307, %v411
  %v413 = vrcp.pop %v331
  %v414 = vmul.f32 %v331, %v413
  %v415 = vsub.f32 1.0, %v414
  %v416 = vmul.f32 %v413, %v415
  %v417 = vadd.f32 %v413, %v416
  %vm418 = vweird.f32 %v331
  %vm419 = vweird.f32 %v413
  %vm420 = vmor %vm418, %vm419
  %v421 = vsel %vm420, %v413, %v417
  %v422 = vand.u32 2147483647, %v331
  %vm423 = vcmp.eq.f32.partialorder %v422, 8.507059e+37
  %v424 = vand.u32 %v331, 2147483648
  %v425 = vor.u32 1.1754944e-38, %v424
  %v426 = vsel %vm423, %v425, %v421
  %v427 = vmul.f32 %v309, %v426
  %v428 = vrcp.pop %v334
  %v429 = vmul.f32 %v334, %v428
  %v430 = vsub.f32 1.0, %v429
  %v431 = vmul.f32 %v428, %v430
  %v432 = vadd.f32 %v428, %v431
  %vm433 = vweird.f32 %v334
  %vm434 = vweird.f32 %v428
  %vm435 = vmor %vm433, %vm434
  %v436 = vsel %vm435, %v428, %v432
  %v437 = vand.u32 2147483647, %v334
  %vm438 = vcmp.eq.f32.partialorder %v437, 8.507059e+37
  %v439 = vand.u32 %v334, 2147483648
  %v440 = vor.u32 1.1754944e-38, %v439
  %v441 = vsel %vm438, %v440, %v436
  %v442 = vmul.f32 %v311, %v441
  %v443 = vrcp.pop %v337
  %v444 = vmul.f32 %v337, %v443
  %v445 = vsub.f32 1.0, %v444
  %v446 = vmul.f32 %v443, %v445
  %v447 = vadd.f32 %v443, %v446
  %vm448 = vweird.f32 %v337
  %vm449 = vweird.f32 %v443
  %vm450 = vmor %vm448, %vm449
  %v451 = vsel %vm450, %v443, %v447
  %v452 = vand.u32 2147483647, %v337
  %vm453 = vcmp.eq.f32.partialorder %v452, 8.507059e+37
  %v454 = vand.u32 %v337, 2147483648
  %v455 = vor.u32 1.1754944e-38, %v454
  %v456 = vsel %vm453, %v455, %v451
  %v457 = vmul.f32 %v313, %v456
  %v459 = vsel %vm265, %v352, 0
  %v462 = vsel %vm265, %v367, 0
  %v465 = vsel %vm265, %v382, 0
  %v468 = vsel %vm265, %v397, 0
  %v471 = vsel %vm265, %v412, 0
  %v474 = vsel %vm265, %v427, 0
  %v477 = vsel %vm265, %v442, 0
  %v480 = vsel %vm265, %v457, 0
  %482 = vmatpush.msra.mxu0 0.0
  %483 = vmatpush.msra.mxu0 0.0
  %484 = vmatpush.msra.mxu0 0.0
  %485 = vmatpush.msra.mxu0 0.0
  %486 = vmatpush.msra.mxu0 0.0
  %487 = vmatpush.msra.mxu0 0.0
  %488 = vmatpush.msra.mxu0 0.0
  %489 = vmatpush.msra.mxu0 0.0
  %490 = vmatpush.msra.mxu0 %v188
  %491 = vmatpush.msra.mxu0 %v186
  %492 = vmatpush.msra.mxu0 %v182
  %493 = vmatpush.msra.mxu0 %v180
  %494 = vmatpush.msra.mxu0 %v176
  %495 = vmatpush.msra.mxu0 %v174
  %496 = vmatpush.msra.mxu0 %v170
  %497 = vmatpush.msra.mxu0 %v168
  %498 = vmatmul.f32.gmra.mxu0 %v459
  %v499 = vpop.f32.mrf.mxu0
  %v500 = vadd.f32 0.0, %v499
  %501 = vmatmul.f32.gmra.mxu0 %v462
  %v502 = vpop.f32.mrf.mxu0
  %v503 = vadd.f32 0.0, %v502
  %504 = vmatmul.f32.gmra.mxu0 %v465
  %v505 = vpop.f32.mrf.mxu0
  %v506 = vadd.f32 0.0, %v505
  %507 = vmatmul.f32.gmra.mxu0 %v468
  %v508 = vpop.f32.mrf.mxu0
  %v509 = vadd.f32 0.0, %v508
  %510 = vmatmul.f32.gmra.mxu0 %v471
  %v511 = vpop.f32.mrf.mxu0
  %v512 = vadd.f32 0.0, %v511
  %513 = vmatmul.f32.gmra.mxu0 %v474
  %v514 = vpop.f32.mrf.mxu0
  %v515 = vadd.f32 0.0, %v514
  %516 = vmatmul.f32.gmra.mxu0 %v477
  %v517 = vpop.f32.mrf.mxu0
  %v518 = vadd.f32 0.0, %v517
  %519 = vmatmul.f32.gmra.mxu0 %v480
  %v520 = vpop.f32.mrf.mxu0
  %v521 = vadd.f32 0.0, %v520
  %522 = vdwg.mxu0
  %525 = vrot.lane.b32.xlu0 %v506, 8
  %v526 = vpop.permute.xlu0 %525
  %527 = vrot.lane.b32.xlu0 %v509, 8
  %v528 = vpop.permute.xlu0 %527
  %533 = vrot.lane.b32.xlu0 %v512, 16
  %v534 = vpop.permute.xlu0 %533
  %535 = vrot.lane.b32.xlu0 %v515, 16
  %v536 = vpop.permute.xlu0 %535
  %541 = vrot.lane.b32.xlu0 %v518, 24
  %v542 = vpop.permute.xlu0 %541
  %543 = vrot.lane.b32.xlu0 %v521, 24
  %v544 = vpop.permute.xlu0 %543
  %v547 = vsel %vm191, %v500, %v526
  %v548 = vsel %vm191, %v503, %v528
  %vm549 = vcmask 130048
  %v550 = vsel %vm549, %v547, %v534
  %v551 = vsel %vm549, %v548, %v536
  %vm552 = vcmask 195584
  %v553 = vsel %vm552, %v550, %v542
  %v554 = vsel %vm552, %v551, %v544
  %v555 = vperm.slane %v49, 2
  %v557 = vsel %vm50, %v553, 0
  %v560 = vsel %vm50, %v554, 0
  %562 = vmatpush.msra.mxu0 0.0
  %563 = vmatpush.msra.mxu0 0.0
  %564 = vmatpush.msra.mxu0 0.0
  %565 = vmatpush.msra.mxu0 0.0
  %566 = vmatpush.msra.mxu0 0.0
  %567 = vmatpush.msra.mxu0 0.0
  %568 = vmatpush.msra.mxu0 0.0
  %569 = vmatpush.msra.mxu0 0.0
  %570 = vmatpush.msra.mxu0 0.0
  %571 = vmatpush.msra.mxu0 0.0
  %572 = vmatpush.msra.mxu0 0.0
  %573 = vmatpush.msra.mxu0 0.0
  %574 = vmatpush.msra.mxu0 %v20
  %575 = vmatpush.msra.mxu0 %v19
  %576 = vmatpush.msra.mxu0 %v18
  %577 = vmatpush.msra.mxu0 %v17
  %578 = vmatmul.f32.gmra.mxu0 %v557
  %v579 = vpop.f32.mrf.mxu0
  %v580 = vadd.f32 %v555, %v579
  %581 = vmatmul.f32.gmra.mxu0 %v560
  %v582 = vpop.f32.mrf.mxu0
  %v583 = vadd.f32 %v555, %v582
  %584 = vdwg.mxu0
  %v585 = vadd.f32 %v11, %v580
  %v586 = vadd.f32 %v12, %v583
  %v587 = vsel %vm50, %v585, 0.0
  %588 = vadd.xlane.f32.xlu0 %v587
  %v589 = vpop.xlane.xlu0 %588
  %v590 = vsel %vm50, %v586, 0.0
  %591 = vadd.xlane.f32.xlu0 %v590
  %v592 = vpop.xlane.xlu0 %591
  %v593 = vmul.f32 %v589, %v63
  %v594 = vmul.f32 %v592, %v63
  %v595 = vsub.f32 %v585, %v593
  %v596 = vsub.f32 %v586, %v594
  %v597 = vmul.f32 %v595, %v595
  %v598 = vmul.f32 %v596, %v596
  %v599 = vsel %vm50, %v597, 0.0
  %600 = vadd.xlane.f32.xlu0 %v599
  %v601 = vpop.xlane.xlu0 %600
  %v602 = vsel %vm50, %v598, 0.0
  %603 = vadd.xlane.f32.xlu0 %v602
  %v604 = vpop.xlane.xlu0 %603
  %v605 = vmul.f32 %v601, %v63
  %v606 = vmul.f32 %v604, %v63
  %v607 = vadd.f32 %v605, 1e-05
  %v608 = vadd.f32 %v606, 1e-05
  %v609 = vrsqrt.pop %v607
  %v610 = vmul.f32 %v609, %v607
  %v611 = vmul.f32 %v610, %v609
  %v612 = vmul.f32 0.5, %v611
  %v613 = vsub.f32 1.5, %v612
  %v614 = vmul.f32 %v609, %v613
  %vm615 = vweird.f32 %v607
  %vm616 = vweird.f32 %v609
  %vm617 = vmor %vm615, %vm616
  %v618 = vsel %vm617, %v609, %v614
  %v619 = vrsqrt.pop %v608
  %v620 = vmul.f32 %v619, %v608
  %v621 = vmul.f32 %v620, %v619
  %v622 = vmul.f32 0.5, %v621
  %v623 = vsub.f32 1.5, %v622
  %v624 = vmul.f32 %v619, %v623
  %vm625 = vweird.f32 %v608
  %vm626 = vweird.f32 %v619
  %vm627 = vmor %vm625, %vm626
  %v628 = vsel %vm627, %v619, %v624
  %v629 = vmul.f32 %v595, %v618
  %v630 = vmul.f32 %v596, %v628
  %v631 = vperm.slane %v49, 3
  %v632 = vmul.f32 %v629, %v631
  %v633 = vmul.f32 %v630, %v631
  %v634 = vperm.slane %v49, 4
  %v635 = vadd.f32 %v632, %v634
  %v636 = vadd.f32 %v633, %v634
  %v637 = vperm.slane %v49, 6
  %v639 = vsel %vm50, %v635, 0
  %v642 = vsel %vm50, %v636, 0
  %644 = vmatpush.msra.mxu0 0.0
  %645 = vmatpush.msra.mxu0 0.0
  %646 = vmatpush.msra.mxu0 0.0
  %647 = vmatpush.msra.mxu0 0.0
  %648 = vmatpush.msra.mxu0 0.0
  %649 = vmatpush.msra.mxu0 0.0
  %650 = vmatpush.msra.mxu0 0.0
  %651 = vmatpush.msra.mxu0 0.0
  %652 = vmatpush.msra.mxu0 0.0
  %653 = vmatpush.msra.mxu0 0.0
  %654 = vmatpush.msra.mxu0 0.0
  %655 = vmatpush.msra.mxu0 0.0
  %656 = vmatpush.msra.mxu0 %v24
  %657 = vmatpush.msra.mxu0 %v23
  %658 = vmatpush.msra.mxu0 %v22
  %659 = vmatpush.msra.mxu0 %v21
  %660 = vmatmul.f32.gmra.mxu0 %v639
  %v661 = vpop.f32.mrf.mxu0
  %v662 = vadd.f32 %v637, %v661
  %663 = vmatmul.f32.gmra.mxu0 %v642
  %v664 = vpop.f32.mrf.mxu0
  %v665 = vadd.f32 %v637, %v664
  %666 = vdwg.mxu0
  %v667 = vmax.f32 %v662, 0.0
  %v668 = vmax.f32 %v665, 0.0
  %v669 = vperm.slane %v49, 5
  %670 = vmatpush.msra.mxu0 %v40
  %671 = vmatpush.msra.mxu0 %v39
  %672 = vmatpush.msra.mxu0 %v38
  %673 = vmatpush.msra.mxu0 %v37
  %674 = vmatpush.msra.mxu0 %v36
  %675 = vmatpush.msra.mxu0 %v35
  %676 = vmatpush.msra.mxu0 %v34
  %677 = vmatpush.msra.mxu0 %v33
  %678 = vmatpush.msra.mxu0 %v32
  %679 = vmatpush.msra.mxu0 %v31
  %680 = vmatpush.msra.mxu0 %v30
  %681 = vmatpush.msra.mxu0 %v29
  %682 = vmatpush.msra.mxu0 %v28
  %683 = vmatpush.msra.mxu0 %v27
  %684 = vmatpush.msra.mxu0 %v26
  %685 = vmatpush.msra.mxu0 %v25
  %686 = vmatmul.f32.gmra.mxu0 %v667
  %v687 = vpop.f32.mrf.mxu0
  %v688 = vadd.f32 %v669, %v687
  %689 = vmatmul.f32.gmra.mxu0 %v668
  %v690 = vpop.f32.mrf.mxu0
  %v691 = vadd.f32 %v669, %v690
  %692 = vdwg.mxu0
  %v693 = vadd.f32 %v585, %v688
  %v694 = vadd.f32 %v586, %v691
  %695 = vst.msk [vmem:[%s2] sm:$0xff] %vm50, %v693
  %696 = vst.msk [vmem:[%s2 + $0x8] sm:$0xff] %vm50, %v694
  // Predicated region
  $region10: #{decoder_block.1} parent=0 // pred_check
    _
  $region11: #{decoder_block.1} parent=0 // pred_check_branch
    %698 = sbr.rel (0) target = $region13
  $region12: #{decoder_block.1} parent=0 // pred_region
    _
  $region13: #{decoder_block.1} parent=0 // pred_fallthru
    _
  // Predicated region
  $region14: #{decoder_block.1} parent=0 // pred_check
    _
  $region15: #{decoder_block.1} parent=0 // pred_check_branch
    %700 = sbr.rel (0) target = $region17
  $region16: #{decoder_block.1} parent=0 // pred_region
    _
  $region17: #{decoder_block.1} parent=0 // pred_fallthru
    _

</llo_original>
